<compile_context>
chip_gen: v7x
topology: tpu7x:2x2x1
jax: 0.10.0
libtpu: 0.0.40
codegen_flags: <defaults>
</compile_context>

<pallas_src>
import jax
import jax.numpy as jnp
from jax.experimental import pallas as pl
from jax.experimental.pallas import tpu as pltpu


def lstm_kernel(x_ref, w_ref, out_ref):
    """Single-layer zero-init LSTM forward over the whole (tiny) sequence.

    x_ref  : (B, T, I+1, H)  input augmented with a constant-1 column (so the bias
                             is just another FMA row) and pre-replicated along the
                             trailing H (lane) axis -> pure elementwise VPU FMAs.
    w_ref  : (4, I+1+H, H)   ALL params packed in one tensor, gate-major (i,f,g,o):
                             rows [0:I] = w_ih^T, row [I] = b_ih + b_hh,
                             rows [I+1:] = w_hh^T.
    out_ref: (B, T, H)       per-timestep hidden states.
    """
    x = x_ref[...].astype(jnp.float32)          # (B, T, I+1, H)
    w = w_ref[...].astype(jnp.float32)          # (4, I+1+H, H)

    B, T, Iaug, H = x_ref.shape

    w_in = w[:, :Iaug, :]                       # (4, I+1, H)  (includes bias row)
    w_rec = w[:, Iaug:, :]                      # (4, H, H)

    # --- Input (+bias) projection hoisted out of the serial recurrence. ---
    # x is already lane-replicated, so every term is a pure elementwise FMA on the
    # VPU; the k-slices below index the sublane axis only (cheap).  Iaug is tiny
    # and static, so the Python loop fully unrolls.
    gx = jnp.zeros((4, B, T, H), jnp.float32)
    for k in range(Iaug):
        gx = gx + x[None, :, :, k, :] * w_in[:, None, None, k, :]

    # Zero initial state (matches torch.zeros(...) init) -- no h0/c0 inputs.
    h = jnp.zeros((B, H), jnp.float32)
    c = jnp.zeros((B, H), jnp.float32)

    hs = []
    for t in range(T):                          # T is small & static -> unroll
        # Recurrent projection: K = H = 2 -> two broadcast VPU FMAs (no MXU push).
        # The per-k lane splat of h is tiny and kept in its known-good form.
        gh = gx[:, :, t, :]                     # (4, B, H), gates on leading axis
        for k in range(H):
            gh = gh + h[None, :, k:k + 1] * w_rec[:, k:k + 1, :]
        # One EUP sigmoid pass over the whole stacked gate tensor + one tanh,
        # instead of 4 separate activation pushes on the serial critical path.
        sg = jax.nn.sigmoid(gh)                 # (4, B, H): rows i, f, (unused), o
        g_g = jnp.tanh(gh[2])
        c = sg[1] * c + sg[0] * g_g             # f*c + i*g
        h = sg[3] * jnp.tanh(c)                 # o*tanh(c)
        hs.append(h)

    # Single coalesced full-tile write (instead of T masked partial stores).
    out_ref[...] = jnp.stack(hs, axis=1).astype(out_ref.dtype)     # (B, T, H)


def lstm_forward(x, w_ih, w_hh, b_ih, b_hh):
    """Wrapper: layout plumbing in plain JAX, recurrence in one Pallas kernel.

    Packs all parameters into one tensor and augments/replicates x so the kernel
    has exactly 2 inputs (2 HBM->VMEM DMAs) and does no in-kernel transposes or
    lane slicing of x.
    """
    B, T, I = x.shape
    H = w_hh.shape[1]

    # PyTorch weight layout: rows = [i; f; g; o] blocks of size H.  Pre-transpose
    # + gate-major reshape, then concat with the folded bias row and w_hh^T into a
    # single packed parameter tensor.
    wih_g = jnp.transpose(w_ih.reshape(4, H, I), (0, 2, 1))        # (4, I, H)
    whh_g = jnp.transpose(w_hh.reshape(4, H, H), (0, 2, 1))        # (4, H, H)
    b_g = (b_ih + b_hh).reshape(4, 1, H)                           # (4, 1, H)
    w_packed = jnp.concatenate([wih_g, b_g, whh_g], axis=1)        # (4, I+1+H, H)

    # Augment x with a ones column (bias becomes one more FMA row) and replicate
    # along the trailing lane axis; pure layout work fused by XLA outside Pallas.
    x_aug = jnp.concatenate([x, jnp.ones((B, T, 1), x.dtype)], axis=2)    # (B,T,I+1)
    x_rep = jnp.broadcast_to(x_aug[..., None], (B, T, I + 1, H))          # (B,T,I+1,H)

    vmem = pltpu.MemorySpace.VMEM
    return pl.pallas_call(
        lstm_kernel,
        out_shape=jax.ShapeDtypeStruct((B, T, H), jnp.float32),
        in_specs=[pl.BlockSpec(memory_space=vmem)] * 2,
        out_specs=pl.BlockSpec(memory_space=vmem),
    )(x_rep, w_packed)


@jax.jit
def model_forward(x1, params):
    """Mirrors Model.forward: run the LSTM-cell RNN with zero init state and
    return output[0] (shape (T, H))."""
    out = lstm_forward(x1, params["w_ih"], params["w_hh"],
                       params["b_ih"], params["b_hh"])
    return out[0]                                                  # x4 = x3[0][0]


def lstm_reference(x, w_ih, w_hh, b_ih, b_hh):
    """Pure-JAX reference (PyTorch LSTMCell semantics) for correctness check."""
    B, T, _ = x.shape
    H = w_hh.shape[1]
    h = jnp.zeros((B, H), jnp.float32)
    c = jnp.zeros((B, H), jnp.float32)
    outs = []
    for t in range(T):
        g = x[:, t, :] @ w_ih.T + h @ w_hh.T + b_ih + b_hh
        i_g = jax.nn.sigmoid(g[:, 0 * H:1 * H])
        f_g = jax.nn.sigmoid(g[:, 1 * H:2 * H])
        g_g = jnp.tanh(g[:, 2 * H:3 * H])
        o_g = jax.nn.sigmoid(g[:, 3 * H:4 * H])
        c = f_g * c + i_g * g_g
        h = o_g * jnp.tanh(c)
        outs.append(h)
    return jnp.stack(outs, axis=1)


def init_params(key, input_size=2, hidden_size=2):
    # PyTorch LSTM default init: U(-1/sqrt(H), 1/sqrt(H)), gate order (i, f, g, o).
    bound = 1.0 / jnp.sqrt(jnp.float32(hidden_size))
    k1, k2, k3, k4 = jax.random.split(key, 4)
    return {
        "w_ih": jax.random.uniform(k1, (4 * hidden_size, input_size),
                                   jnp.float32, -bound, bound),
        "w_hh": jax.random.uniform(k2, (4 * hidden_size, hidden_size),
                                   jnp.float32, -bound, bound),
        "b_ih": jax.random.uniform(k3, (4 * hidden_size,),
                                   jnp.float32, -bound, bound),
        "b_hh": jax.random.uniform(k4, (4 * hidden_size,),
                                   jnp.float32, -bound, bound),
    }


if __name__ == "__main__":
    key = jax.random.PRNGKey(0)
    k_x, k_p = jax.random.split(key)

    # x1 = torch.randn(1, 2, 2)  -> (batch=1, seq=2, input=2)
    x1 = jax.random.normal(k_x, (1, 2, 2), dtype=jnp.float32)
    params = init_params(k_p, input_size=2, hidden_size=2)

    y = model_forward(x1, params)
    y = jax.block_until_ready(y)
    assert y.shape == (2, 2), y.shape

    y_ref = lstm_reference(x1, params["w_ih"], params["w_hh"],
                           params["b_ih"], params["b_hh"])[0]
    assert jnp.allclose(y, y_ref, atol=1e-4, rtol=1e-4), (y, y_ref)

    print("KERNEL_OK")
</pallas_src>

<mosaic_0001>
module attributes {stable_mosaic.version = 11 : i64} {
  func.func @lstm_kernel(%arg0: memref<1x2x3x2xf32, #tpu.memory_space<vmem>>, %arg1: memref<4x5x2xf32, #tpu.memory_space<vmem>>, %arg2: memref<1x2x2xf32, #tpu.memory_space<vmem>>) attributes {dimension_semantics = [], scalar_prefetch = 0 : i64, scratch_operands = 0 : i64, tpu.core_type = #tpu.core_type<tc>} {
    %c0 = arith.constant 0 : index
    %c0_0 = arith.constant 0 : index
    %c0_1 = arith.constant 0 : index
    %c0_2 = arith.constant 0 : index
    %0 = vector.load %arg0[%c0, %c0_0, %c0_1, %c0_2] : memref<1x2x3x2xf32, #tpu.memory_space<vmem>>, vector<1x2x3x2xf32>
    %c0_3 = arith.constant 0 : index
    %c0_4 = arith.constant 0 : index
    %c0_5 = arith.constant 0 : index
    %1 = vector.load %arg1[%c0_3, %c0_4, %c0_5] : memref<4x5x2xf32, #tpu.memory_space<vmem>>, vector<4x5x2xf32>
    %2 = vector.extract_strided_slice %1 {offsets = [0, 0, 0], sizes = [4, 3, 2], strides = [1, 1, 1]} : vector<4x5x2xf32> to vector<4x3x2xf32>
    %3 = vector.extract_strided_slice %1 {offsets = [0, 3, 0], sizes = [4, 2, 2], strides = [1, 1, 1]} : vector<4x5x2xf32> to vector<4x2x2xf32>
    %cst = arith.constant 0.000000e+00 : f32
    %4 = vector.broadcast %cst : f32 to vector<4x1x2x2xf32>
    %5 = vector.extract_strided_slice %0 {offsets = [0, 0, 0, 0], sizes = [1, 2, 1, 2], strides = [1, 1, 1, 1]} : vector<1x2x3x2xf32> to vector<1x2x1x2xf32>
    %6 = vector.shape_cast %5 : vector<1x2x1x2xf32> to vector<1x2x2xf32>
    %7 = vector.shape_cast %6 : vector<1x2x2xf32> to vector<1x1x2x2xf32>
    %8 = vector.extract_strided_slice %2 {offsets = [0, 0, 0], sizes = [4, 1, 2], strides = [1, 1, 1]} : vector<4x3x2xf32> to vector<4x1x2xf32>
    %9 = vector.shape_cast %8 : vector<4x1x2xf32> to vector<4x2xf32>
    %10 = vector.shape_cast %9 : vector<4x2xf32> to vector<4x1x1x2xf32>
    %11 = vector.broadcast %7 : vector<1x1x2x2xf32> to vector<4x1x2x2xf32>
    %12 = vector.broadcast %10 : vector<4x1x1x2xf32> to vector<4x1x2x2xf32>
    %13 = arith.mulf %11, %12 : vector<4x1x2x2xf32>
    %14 = arith.addf %4, %13 : vector<4x1x2x2xf32>
    %15 = vector.extract_strided_slice %0 {offsets = [0, 0, 1, 0], sizes = [1, 2, 1, 2], strides = [1, 1, 1, 1]} : vector<1x2x3x2xf32> to vector<1x2x1x2xf32>
    %16 = vector.shape_cast %15 : vector<1x2x1x2xf32> to vector<1x2x2xf32>
    %17 = vector.shape_cast %16 : vector<1x2x2xf32> to vector<1x1x2x2xf32>
    %18 = vector.extract_strided_slice %2 {offsets = [0, 1, 0], sizes = [4, 1, 2], strides = [1, 1, 1]} : vector<4x3x2xf32> to vector<4x1x2xf32>
    %19 = vector.shape_cast %18 : vector<4x1x2xf32> to vector<4x2xf32>
    %20 = vector.shape_cast %19 : vector<4x2xf32> to vector<4x1x1x2xf32>
    %21 = vector.broadcast %17 : vector<1x1x2x2xf32> to vector<4x1x2x2xf32>
    %22 = vector.broadcast %20 : vector<4x1x1x2xf32> to vector<4x1x2x2xf32>
    %23 = arith.mulf %21, %22 : vector<4x1x2x2xf32>
    %24 = arith.addf %14, %23 : vector<4x1x2x2xf32>
    %25 = vector.extract_strided_slice %0 {offsets = [0, 0, 2, 0], sizes = [1, 2, 1, 2], strides = [1, 1, 1, 1]} : vector<1x2x3x2xf32> to vector<1x2x1x2xf32>
    %26 = vector.shape_cast %25 : vector<1x2x1x2xf32> to vector<1x2x2xf32>
    %27 = vector.shape_cast %26 : vector<1x2x2xf32> to vector<1x1x2x2xf32>
    %28 = vector.extract_strided_slice %2 {offsets = [0, 2, 0], sizes = [4, 1, 2], strides = [1, 1, 1]} : vector<4x3x2xf32> to vector<4x1x2xf32>
    %29 = vector.shape_cast %28 : vector<4x1x2xf32> to vector<4x2xf32>
    %30 = vector.shape_cast %29 : vector<4x2xf32> to vector<4x1x1x2xf32>
    %31 = vector.broadcast %27 : vector<1x1x2x2xf32> to vector<4x1x2x2xf32>
    %32 = vector.broadcast %30 : vector<4x1x1x2xf32> to vector<4x1x2x2xf32>
    %33 = arith.mulf %31, %32 : vector<4x1x2x2xf32>
    %34 = arith.addf %24, %33 : vector<4x1x2x2xf32>
    %cst_6 = arith.constant 0.000000e+00 : f32
    %35 = vector.broadcast %cst_6 : f32 to vector<1x2xf32>
    %cst_7 = arith.constant 0.000000e+00 : f32
    %36 = vector.broadcast %cst_7 : f32 to vector<1x2xf32>
    %37 = vector.extract_strided_slice %34 {offsets = [0, 0, 0, 0], sizes = [4, 1, 1, 2], strides = [1, 1, 1, 1]} : vector<4x1x2x2xf32> to vector<4x1x1x2xf32>
    %38 = vector.shape_cast %37 : vector<4x1x1x2xf32> to vector<4x1x2xf32>
    %39 = vector.extract_strided_slice %35 {offsets = [0, 0], sizes = [1, 1], strides = [1, 1]} : vector<1x2xf32> to vector<1x1xf32>
    %40 = vector.shape_cast %39 : vector<1x1xf32> to vector<1x1x1xf32>
    %41 = vector.extract_strided_slice %3 {offsets = [0, 0, 0], sizes = [4, 1, 2], strides = [1, 1, 1]} : vector<4x2x2xf32> to vector<4x1x2xf32>
    %42 = vector.broadcast %40 : vector<1x1x1xf32> to vector<4x1x2xf32>
    %43 = arith.mulf %42, %41 : vector<4x1x2xf32>
    %44 = arith.addf %38, %43 : vector<4x1x2xf32>
    %45 = vector.extract_strided_slice %35 {offsets = [0, 1], sizes = [1, 1], strides = [1, 1]} : vector<1x2xf32> to vector<1x1xf32>
    %46 = vector.shape_cast %45 : vector<1x1xf32> to vector<1x1x1xf32>
    %47 = vector.extract_strided_slice %3 {offsets = [0, 1, 0], sizes = [4, 1, 2], strides = [1, 1, 1]} : vector<4x2x2xf32> to vector<4x1x2xf32>
    %48 = vector.broadcast %46 : vector<1x1x1xf32> to vector<4x1x2xf32>
    %49 = arith.mulf %48, %47 : vector<4x1x2xf32>
    %50 = arith.addf %44, %49 : vector<4x1x2xf32>
    %51 = arith.negf %50 : vector<4x1x2xf32>
    %52 = math.exp %51 : vector<4x1x2xf32>
    %cst_8 = arith.constant 1.000000e+00 : f32
    %53 = vector.broadcast %cst_8 : f32 to vector<4x1x2xf32>
    %54 = arith.addf %53, %52 : vector<4x1x2xf32>
    %55 = arith.divf %53, %54 : vector<4x1x2xf32>
    %56 = vector.extract_strided_slice %50 {offsets = [2, 0, 0], sizes = [1, 1, 2], strides = [1, 1, 1]} : vector<4x1x2xf32> to vector<1x1x2xf32>
    %57 = vector.shape_cast %56 : vector<1x1x2xf32> to vector<1x2xf32>
    %58 = math.tanh %57 : vector<1x2xf32>
    %59 = vector.extract_strided_slice %55 {offsets = [1, 0, 0], sizes = [1, 1, 2], strides = [1, 1, 1]} : vector<4x1x2xf32> to vector<1x1x2xf32>
    %60 = vector.shape_cast %59 : vector<1x1x2xf32> to vector<1x2xf32>
    %61 = arith.mulf %60, %36 : vector<1x2xf32>
    %62 = vector.extract_strided_slice %55 {offsets = [0, 0, 0], sizes = [1, 1, 2], strides = [1, 1, 1]} : vector<4x1x2xf32> to vector<1x1x2xf32>
    %63 = vector.shape_cast %62 : vector<1x1x2xf32> to vector<1x2xf32>
    %64 = arith.mulf %63, %58 : vector<1x2xf32>
    %65 = arith.addf %61, %64 : vector<1x2xf32>
    %66 = vector.extract_strided_slice %55 {offsets = [3, 0, 0], sizes = [1, 1, 2], strides = [1, 1, 1]} : vector<4x1x2xf32> to vector<1x1x2xf32>
    %67 = vector.shape_cast %66 : vector<1x1x2xf32> to vector<1x2xf32>
    %68 = math.tanh %65 : vector<1x2xf32>
    %69 = arith.mulf %67, %68 : vector<1x2xf32>
    %70 = vector.extract_strided_slice %34 {offsets = [0, 0, 1, 0], sizes = [4, 1, 1, 2], strides = [1, 1, 1, 1]} : vector<4x1x2x2xf32> to vector<4x1x1x2xf32>
    %71 = vector.shape_cast %70 : vector<4x1x1x2xf32> to vector<4x1x2xf32>
    %72 = vector.extract_strided_slice %69 {offsets = [0, 0], sizes = [1, 1], strides = [1, 1]} : vector<1x2xf32> to vector<1x1xf32>
    %73 = vector.shape_cast %72 : vector<1x1xf32> to vector<1x1x1xf32>
    %74 = vector.extract_strided_slice %3 {offsets = [0, 0, 0], sizes = [4, 1, 2], strides = [1, 1, 1]} : vector<4x2x2xf32> to vector<4x1x2xf32>
    %75 = vector.broadcast %73 : vector<1x1x1xf32> to vector<4x1x2xf32>
    %76 = arith.mulf %75, %74 : vector<4x1x2xf32>
    %77 = arith.addf %71, %76 : vector<4x1x2xf32>
    %78 = vector.extract_strided_slice %69 {offsets = [0, 1], sizes = [1, 1], strides = [1, 1]} : vector<1x2xf32> to vector<1x1xf32>
    %79 = vector.shape_cast %78 : vector<1x1xf32> to vector<1x1x1xf32>
    %80 = vector.extract_strided_slice %3 {offsets = [0, 1, 0], sizes = [4, 1, 2], strides = [1, 1, 1]} : vector<4x2x2xf32> to vector<4x1x2xf32>
    %81 = vector.broadcast %79 : vector<1x1x1xf32> to vector<4x1x2xf32>
    %82 = arith.mulf %81, %80 : vector<4x1x2xf32>
    %83 = arith.addf %77, %82 : vector<4x1x2xf32>
    %84 = arith.negf %83 : vector<4x1x2xf32>
    %85 = math.exp %84 : vector<4x1x2xf32>
    %cst_9 = arith.constant 1.000000e+00 : f32
    %86 = vector.broadcast %cst_9 : f32 to vector<4x1x2xf32>
    %87 = arith.addf %86, %85 : vector<4x1x2xf32>
    %88 = arith.divf %86, %87 : vector<4x1x2xf32>
    %89 = vector.extract_strided_slice %83 {offsets = [2, 0, 0], sizes = [1, 1, 2], strides = [1, 1, 1]} : vector<4x1x2xf32> to vector<1x1x2xf32>
    %90 = vector.shape_cast %89 : vector<1x1x2xf32> to vector<1x2xf32>
    %91 = math.tanh %90 : vector<1x2xf32>
    %92 = vector.extract_strided_slice %88 {offsets = [1, 0, 0], sizes = [1, 1, 2], strides = [1, 1, 1]} : vector<4x1x2xf32> to vector<1x1x2xf32>
    %93 = vector.shape_cast %92 : vector<1x1x2xf32> to vector<1x2xf32>
    %94 = arith.mulf %93, %65 : vector<1x2xf32>
    %95 = vector.extract_strided_slice %88 {offsets = [0, 0, 0], sizes = [1, 1, 2], strides = [1, 1, 1]} : vector<4x1x2xf32> to vector<1x1x2xf32>
    %96 = vector.shape_cast %95 : vector<1x1x2xf32> to vector<1x2xf32>
    %97 = arith.mulf %96, %91 : vector<1x2xf32>
    %98 = arith.addf %94, %97 : vector<1x2xf32>
    %99 = vector.extract_strided_slice %88 {offsets = [3, 0, 0], sizes = [1, 1, 2], strides = [1, 1, 1]} : vector<4x1x2xf32> to vector<1x1x2xf32>
    %100 = vector.shape_cast %99 : vector<1x1x2xf32> to vector<1x2xf32>
    %101 = math.tanh %98 : vector<1x2xf32>
    %102 = arith.mulf %100, %101 : vector<1x2xf32>
    %103 = vector.shape_cast %69 : vector<1x2xf32> to vector<1x1x2xf32>
    %104 = vector.shape_cast %102 : vector<1x2xf32> to vector<1x1x2xf32>
    %105 = tpu.concatenate %103, %104 in 1 : vector<1x1x2xf32>, vector<1x1x2xf32> -> vector<1x2x2xf32>
    %c0_10 = arith.constant 0 : index
    %c0_11 = arith.constant 0 : index
    %c0_12 = arith.constant 0 : index
    %106 = vector.load %arg2[%c0_10, %c0_11, %c0_12] : memref<1x2x2xf32, #tpu.memory_space<vmem>>, vector<1x2x2xf32>
    tpu.vector_store %arg2[%c0_10, %c0_11, %c0_12], %105 {strides = array<i32>} : memref<1x2x2xf32, #tpu.memory_space<vmem>>, vector<1x2x2xf32>,
    return
  }
}

</mosaic_0001>

<llo_original>
// kernel: model_forward.1
$region0: #{model_forward.1}
  #allocation0 [shape = 'u32[]', space=smem, size = 0x4, offset = 0x4, fixed_abs, tag = 'smem constant byte address 0x4 - core index']
  #allocation1 [shape = 'u32[144,128]{1,0:T(1,128)}', space=vmem, size = 0x12000, scoped, tag = 'internal scratch']
  %s0 = inlined_call_operand.vmem [shape: f32[1,2,3,2], index: 0, kind: input, shape index: {}]
  %s1 = inlined_call_operand.vmem [shape: f32[4,5,2], index: 1, kind: input, shape index: {}]
  %s2 = inlined_call_operand.hbm [shape: f32[1,2,2], index: 2, kind: output, shape index: {}]
  %s3 = sld [smem:[#allocation0]]
  $region18: #{model_forward.1} parent=0
    _
  %s5 = ssub.s32 1, %s3
  %s6 = scalar_select 0, %s5, %s3
  $region1: #{model_forward.1} parent=0
    #allocation2 [shape = 'u8[1024]{0}', space=vmem, size = 0x400, scoped, tag = 'output window, operand 0, single buffered']
    #allocation3 [shape = 's32[1]{0}', space=sflag, size = 0x4, scoped, tag = 'scoped memory for model_forward.1']
    %7 = vsyncpa [#allocation3], 0
    // Predicated region
    $region2: #{model_forward.1} parent=1 // pred_check
      _
    $region3: #{model_forward.1} parent=1 // pred_check_branch
      %9 = sbr.rel (0) target = $region5
    $region4: #{model_forward.1} parent=1 // pred_region
      _
    $region5: #{model_forward.1} parent=1 // pred_fallthru
      _
    // Predicated region
    $region6: #{model_forward.1} parent=1 // pred_check
      _
    $region7: #{model_forward.1} parent=1 // pred_check_branch
      %11 = sbr.rel (0) target = $region9
    $region8: #{model_forward.1} parent=1 // pred_region
      _
    $region9: #{model_forward.1} parent=1 // pred_fallthru
      _
    %v12 = vld [vmem:[%s0] sm:$0x7]
    %v13 = vld [vmem:[%s0 + $0x4] sm:$0x7]
    %v14 = vld [vmem:[%s1] sm:$0x1f]
    %v15 = vld [vmem:[%s1 + $0x8] sm:$0x1f]
    %v16 = vld [vmem:[%s1 + $0x10] sm:$0x1f]
    %v17 = vld [vmem:[%s1 + $0x18] sm:$0x1f]
    %v18 = vlaneseq
    %v19 = vshrl.u32 %v18, 7
    %v20 = vsub.s32 0, %v19
    %v21 = vrot.slane %v14, %v20
    %v22 = vlaneseq
    %v23 = vshrl.u32 %v22, 7
    %v24 = vsub.s32 0, %v23
    %v25 = vrot.slane %v15, %v24
    %v26 = vlaneseq
    %v27 = vshrl.u32 %v26, 7
    %v28 = vsub.s32 0, %v27
    %v29 = vrot.slane %v16, %v28
    %v30 = vlaneseq
    %v31 = vshrl.u32 %v30, 7
    %v32 = vsub.s32 0, %v31
    %v33 = vrot.slane %v17, %v32
    %v34 = vmul.f32 %v12, %v21
    %v35 = vmul.f32 %v13, %v21
    %v36 = vmul.f32 %v12, %v25
    %v37 = vmul.f32 %v13, %v25
    %v38 = vmul.f32 %v12, %v29
    %v39 = vmul.f32 %v13, %v29
    %v40 = vmul.f32 %v12, %v33
    %v41 = vmul.f32 %v13, %v33
    %v42 = vadd.f32 %v34, 0.0
    %v43 = vadd.f32 %v35, 0.0
    %v44 = vadd.f32 %v36, 0.0
    %v45 = vadd.f32 %v37, 0.0
    %v46 = vadd.f32 %v38, 0.0
    %v47 = vadd.f32 %v39, 0.0
    %v48 = vadd.f32 %v40, 0.0
    %v49 = vadd.f32 %v41, 0.0
    %v50 = vlaneseq
    %v51 = vshrl.u32 %v50, 7
    %v52 = vsub.s32 1, %v51
    %v53 = vrot.slane %v14, %v52
    %v54 = vlaneseq
    %v55 = vshrl.u32 %v54, 7
    %v56 = vsub.s32 1, %v55
    %v57 = vrot.slane %v15, %v56
    %v58 = vlaneseq
    %v59 = vshrl.u32 %v58, 7
    %v60 = vsub.s32 1, %v59
    %v61 = vrot.slane %v16, %v60
    %v62 = vlaneseq
    %v63 = vshrl.u32 %v62, 7
    %v64 = vsub.s32 1, %v63
    %v65 = vrot.slane %v17, %v64
    %v66 = vmul.f32 %v12, %v53
    %v67 = vmul.f32 %v13, %v53
    %v68 = vmul.f32 %v12, %v57
    %v69 = vmul.f32 %v13, %v57
    %v70 = vmul.f32 %v12, %v61
    %v71 = vmul.f32 %v13, %v61
    %v72 = vmul.f32 %v12, %v65
    %v73 = vmul.f32 %v13, %v65
    %v82 = vrot.slane %v66, 1
    %v83 = vrot.slane %v67, 1
    %v84 = vrot.slane %v68, 1
    %v85 = vrot.slane %v69, 1
    %v86 = vrot.slane %v70, 1
    %v87 = vrot.slane %v71, 1
    %v88 = vrot.slane %v72, 1
    %v89 = vrot.slane %v73, 1
    %v98 = vadd.f32 %v42, %v82
    %v99 = vadd.f32 %v43, %v83
    %v100 = vadd.f32 %v44, %v84
    %v101 = vadd.f32 %v45, %v85
    %v102 = vadd.f32 %v46, %v86
    %v103 = vadd.f32 %v47, %v87
    %v104 = vadd.f32 %v48, %v88
    %v105 = vadd.f32 %v49, %v89
    %v106 = vlaneseq
    %v107 = vshrl.u32 %v106, 7
    %v108 = vsub.s32 2, %v107
    %v109 = vrot.slane %v14, %v108
    %v110 = vlaneseq
    %v111 = vshrl.u32 %v110, 7
    %v112 = vsub.s32 2, %v111
    %v113 = vrot.slane %v15, %v112
    %v114 = vlaneseq
    %v115 = vshrl.u32 %v114, 7
    %v116 = vsub.s32 2, %v115
    %v117 = vrot.slane %v16, %v116
    %v118 = vlaneseq
    %v119 = vshrl.u32 %v118, 7
    %v120 = vsub.s32 2, %v119
    %v121 = vrot.slane %v17, %v120
    %v122 = vmul.f32 %v12, %v109
    %v123 = vmul.f32 %v13, %v109
    %v124 = vmul.f32 %v12, %v113
    %v125 = vmul.f32 %v13, %v113
    %v126 = vmul.f32 %v12, %v117
    %v127 = vmul.f32 %v13, %v117
    %v128 = vmul.f32 %v12, %v121
    %v129 = vmul.f32 %v13, %v121
    %v138 = vrot.slane %v122, 2
    %v139 = vrot.slane %v123, 2
    %v140 = vrot.slane %v124, 2
    %v141 = vrot.slane %v125, 2
    %v142 = vrot.slane %v126, 2
    %v143 = vrot.slane %v127, 2
    %v144 = vrot.slane %v128, 2
    %v145 = vrot.slane %v129, 2
    %v154 = vadd.f32 %v98, %v138
    %v155 = vadd.f32 %v99, %v139
    %v156 = vadd.f32 %v100, %v140
    %v157 = vadd.f32 %v101, %v141
    %v158 = vadd.f32 %v102, %v142
    %v159 = vadd.f32 %v103, %v143
    %v160 = vadd.f32 %v104, %v144
    %v161 = vadd.f32 %v105, %v145
    %v162 = vmul.f32 %v14, 0.0
    %v163 = vmul.f32 %v15, 0.0
    %v164 = vmul.f32 %v16, 0.0
    %v165 = vmul.f32 %v17, 0.0
    %v170 = vrot.slane %v162, 3
    %v171 = vrot.slane %v163, 3
    %v172 = vrot.slane %v164, 3
    %v173 = vrot.slane %v165, 3
    %v178 = vadd.f32 %v154, %v170
    %v179 = vadd.f32 %v156, %v171
    %v180 = vadd.f32 %v158, %v172
    %v181 = vadd.f32 %v160, %v173
    %v182 = vrot.slane %v162, 4
    %v183 = vrot.slane %v163, 4
    %v184 = vrot.slane %v164, 4
    %v185 = vrot.slane %v165, 4
    %v190 = vadd.f32 %v178, %v182
    %v191 = vadd.f32 %v179, %v183
    %v192 = vadd.f32 %v180, %v184
    %v193 = vadd.f32 %v181, %v185
    %v194 = vxor.u32 %v190, 2147483648
    %v195 = vxor.u32 %v191, 2147483648
    %v196 = vxor.u32 %v193, 2147483648
    %v197 = vmul.f32 %v194, 1.442695
    %v198 = vpow.pop %v197
    %v199 = vmul.f32 %v195, 1.442695
    %v200 = vpow.pop %v199
    %v201 = vmul.f32 %v196, 1.442695
    %v202 = vpow.pop %v201
    %v203 = vadd.f32 %v198, 1.0
    %v204 = vadd.f32 %v200, 1.0
    %v205 = vadd.f32 %v202, 1.0
    %v206 = vrcp.pop %v203
    %v207 = vmul.f32 1.0, %v206
    %v208 = vrcp.pop %v204
    %v209 = vmul.f32 1.0, %v208
    %v210 = vrcp.pop %v205
    %v211 = vmul.f32 1.0, %v210
    %v212 = vtanh.pop %v192
    %v213 = vmul.f32 %v209, 0.0
    %v214 = vmul.f32 %v207, %v212
    %v215 = vadd.f32 %v213, %v214
    %v216 = vtanh.pop %v215
    %v217 = vmul.f32 %v211, %v216
    %219 = vset.pattern.permute.xlu0 0
    %220 = vperm.xlu0 %219, %v217
    %v221 = vpop.permute.xlu0 %220
    %v227 = vrot.slane %v14, 3
    %v228 = vrot.slane %v15, 3
    %v229 = vrot.slane %v16, 3
    %v230 = vrot.slane %v17, 3
    %v235 = vmul.f32 %v221, %v227
    %v236 = vmul.f32 %v221, %v228
    %v237 = vmul.f32 %v221, %v229
    %v238 = vmul.f32 %v221, %v230
    %v239 = vadd.f32 %v155, %v235
    %v240 = vadd.f32 %v157, %v236
    %v241 = vadd.f32 %v159, %v237
    %v242 = vadd.f32 %v161, %v238
    %243 = vset.pattern.permute.xlu0 1
    %244 = vperm.xlu0 %243, %v217
    %v245 = vpop.permute.xlu0 %244
    %v247 = vrot.slane %v14, 4
    %v248 = vrot.slane %v15, 4
    %v249 = vrot.slane %v16, 4
    %v250 = vrot.slane %v17, 4
    %v255 = vmul.f32 %v245, %v247
    %v256 = vmul.f32 %v245, %v248
    %v257 = vmul.f32 %v245, %v249
    %v258 = vmul.f32 %v245, %v250
    %v259 = vadd.f32 %v239, %v255
    %v260 = vadd.f32 %v240, %v256
    %v261 = vadd.f32 %v241, %v257
    %v262 = vadd.f32 %v242, %v258
    %v263 = vxor.u32 %v259, 2147483648
    %v264 = vxor.u32 %v260, 2147483648
    %v265 = vxor.u32 %v262, 2147483648
    %v266 = vmul.f32 %v263, 1.442695
    %v267 = vpow.pop %v266
    %v268 = vmul.f32 %v264, 1.442695
    %v269 = vpow.pop %v268
    %v270 = vmul.f32 %v265, 1.442695
    %v271 = vpow.pop %v270
    %v272 = vadd.f32 %v267, 1.0
    %v273 = vadd.f32 %v269, 1.0
    %v274 = vadd.f32 %v271, 1.0
    %v275 = vrcp.pop %v272
    %v276 = vmul.f32 1.0, %v275
    %v277 = vrcp.pop %v273
    %v278 = vmul.f32 1.0, %v277
    %v279 = vrcp.pop %v274
    %v280 = vmul.f32 1.0, %v279
    %v281 = vtanh.pop %v261
    %v282 = vmul.f32 %v278, %v215
    %v283 = vmul.f32 %v276, %v281
    %v284 = vadd.f32 %v282, %v283
    %v285 = vtanh.pop %v284
    %v286 = vmul.f32 %v280, %v285
    %v288 = vrot.slane %v286, 7
    %vm290 = vcmask 1040384
    %v291 = vsel %vm290, %v217, %v288
    %vm292 = vcmask 9216
    %293 = vst.msk [vmem:[#allocation2] sm:$0x3] %vm292, %v291
    // Predicated region
    $region10: #{model_forward.1} parent=1 // pred_check
      _
    $region11: #{model_forward.1} parent=1 // pred_check_branch
      %295 = sbr.rel (0) target = $region13
    $region12: #{model_forward.1} parent=1 // pred_region
      %s297 = ssub.s32 32, 32
      %298 = vsyncadd [#allocation3], %s297
      %s300 = sshll.u32 [#allocation2], 4
      %s301 = int_to_ptr.vmem [resolvable:$true] %s300
      %303 = dma.vmem_to_hbm [thread:$0]  %s301, 32, %s2, [#allocation3]
    $region13: #{model_forward.1} parent=1 // pred_fallthru
      _
    // Predicated region
    $region14: #{model_forward.1} parent=1 // pred_check
      _
    $region15: #{model_forward.1} parent=1 // pred_check_branch
      %305 = sbr.rel (0) target = $region17
    $region16: #{model_forward.1} parent=1 // pred_region
      %306 = dma.done [#allocation3], 32
    $region17: #{model_forward.1} parent=1 // pred_fallthru
      _
    %307 = vsyncpa [#allocation3], 1

</llo_original>
